<compile_context>
chip_gen: v5e
topology: v5e:2x2
jax: 0.10.0
libtpu: 0.0.40
codegen_flags: <defaults>
</compile_context>

<pallas_src>
import jax
import jax.numpy as jnp
from jax.experimental import pallas as pl
from jax.experimental.pallas import tpu as pltpu

_LANE = 128


def _square_kernel(x_ref, o_ref):
    # Elementwise hot path: one VPU multiply over the whole VMEM tile.
    v = x_ref[...]
    o_ref[...] = v * v


def _sublane(dtype) -> int:
    # Packed sublane group: 8 for 4-byte, 16 for 2-byte, 32 for 1-byte dtypes.
    return max(8, 32 // jnp.dtype(dtype).itemsize)


def _chip_config():
    """Generation-aware (block-byte target, scoped-VMEM limit, #TensorCores)."""
    try:
        kind = jax.devices()[0].device_kind.lower()
    except Exception:
        kind = ""
    if "v7" in kind or "7x" in kind:
        # 64 MiB physical VMEM, 3.2 TB/s HBM, 2 TCs: 8 MiB blocks keep the
        # per-step overhead <10% of wall; 4 buffers = 32 MiB < 48 MiB limit.
        return 8 << 20, 48 << 20, 2
    if "v6" in kind:
        # 128 MiB physical VMEM, 1.4 TB/s HBM, 1 TC.
        return 12 << 20, 64 << 20, 1
    if "v5" in kind:
        # v5e/v5p, ~0.8 TB/s HBM, 1 TC: per-step overhead already small.
        return 4 << 20, 32 << 20, 1
    # Unknown generation: conservative defaults.
    return 4 << 20, 32 << 20, 1


def _pick_tile(total: int, unit: int, unit_bytes: int,
               target_bytes: int, num_tc: int) -> int:
    """Pick a tile along the single blocked axis, in multiples of `unit`."""
    tile = max(unit, (target_bytes // unit_bytes) * unit)
    if tile >= total:
        if num_tc > 1 and total > unit:
            # A single block would leave one v7x TensorCore idle: split so the
            # "parallel" grid axis can be sharded across both cores.
            tile = pl.cdiv(pl.cdiv(total, unit), num_tc) * unit
        else:
            tile = total  # full-extent block; no forced split on 1-TC chips
    return tile


def quadratic(x: jax.Array, *, donate_input: bool = False) -> jax.Array:
    """Elementwise x**2 computed in a Pallas TPU kernel."""
    orig_shape = x.shape
    dtype = x.dtype
    n = x.size
    if n == 0:
        return x

    itemsize = jnp.dtype(dtype).itemsize
    sublane = _sublane(dtype)
    target_bytes, vmem_limit, num_tc = _chip_config()

    compiler_params = pltpu.CompilerParams(
        dimension_semantics=("parallel",),
        vmem_limit_bytes=vmem_limit,
    )
    cost = pl.CostEstimate(flops=n, transcendentals=0,
                           bytes_accessed=2 * n * itemsize)
    aliases = {0: 0} if donate_input else {}

    x_flat = jnp.ravel(x)  # reshape of a contiguous array: layout bitcast

    if n % _LANE == 0:
        # Lane-dense (rows, 128) slab: free reshape, unmasked stores.
        rows = n // _LANE
        x2d = x_flat.reshape(rows, _LANE)
        row_tile = _pick_tile(rows, sublane, sublane * _LANE * itemsize,
                              target_bytes, num_tc)
        grid = (pl.cdiv(rows, row_tile),)  # uneven last block → masked writeback
        out = pl.pallas_call(
            _square_kernel,
            out_shape=jax.ShapeDtypeStruct((rows, _LANE), dtype),
            grid_spec=pltpu.PrefetchScalarGridSpec(
                num_scalar_prefetch=0,
                grid=grid,
                in_specs=[pl.BlockSpec((row_tile, _LANE), lambda i: (i, 0))],
                out_specs=pl.BlockSpec((row_tile, _LANE), lambda i: (i, 0)),
            ),
            compiler_params=compiler_params,
            cost_estimate=cost,
            input_output_aliases=aliases,
        )(x2d)
    else:
        # Ragged size: 1-D blocks over the flat array. The cdiv grid masks the
        # partial last block, so no full-array pad/slice copies are needed.
        group = sublane * _LANE
        elem_tile = _pick_tile(n, group, group * itemsize, target_bytes, num_tc)
        grid = (pl.cdiv(n, elem_tile),)
        out = pl.pallas_call(
            _square_kernel,
            out_shape=jax.ShapeDtypeStruct((n,), dtype),
            grid_spec=pltpu.PrefetchScalarGridSpec(
                num_scalar_prefetch=0,
                grid=grid,
                in_specs=[pl.BlockSpec((elem_tile,), lambda i: (i,))],
                out_specs=pl.BlockSpec((elem_tile,), lambda i: (i,)),
            ),
            compiler_params=compiler_params,
            cost_estimate=cost,
            input_output_aliases=aliases,
        )(x_flat)

    return out.reshape(orig_shape)


if __name__ == "__main__":
    key = jax.random.PRNGKey(0)
    k1, k2, k3 = jax.random.split(key, 3)

    # Small NCHW input consistent with the module's elementwise forward.
    x = jax.random.normal(k1, (2, 4, 16, 16), dtype=jnp.float32)
    y = quadratic(x)
    jax.block_until_ready(y)
    assert y.shape == x.shape and y.dtype == x.dtype
    assert jnp.allclose(y, x ** 2, atol=1e-6, rtol=1e-6)

    # Row count not a multiple of the tile: exercises the cdiv grid / masked
    # last block on the aligned (rows, 128) path.
    x2 = jax.random.normal(k2, (1, 3, 32, 32), dtype=jnp.float32)
    y2 = quadratic(x2)
    jax.block_until_ready(y2)
    assert jnp.allclose(y2, x2 ** 2, atol=1e-6, rtol=1e-6)

    # Ragged size (n % 128 != 0): exercises the copy-free 1-D path that
    # replaced the full-array pad + slice.
    x3 = jax.random.normal(k3, (3, 5, 91), dtype=jnp.float32)
    y3 = quadratic(x3)
    jax.block_until_ready(y3)
    assert y3.shape == x3.shape and y3.dtype == x3.dtype
    assert jnp.allclose(y3, x3 ** 2, atol=1e-6, rtol=1e-6)

    print("KERNEL_OK")
</pallas_src>

<mosaic_0001>
module attributes {stable_mosaic.version = 11 : i64} {
  func.func @_square_kernel(%arg0: i32, %arg1: memref<16x128xf32, #tpu.memory_space<vmem>>, %arg2: memref<16x128xf32, #tpu.memory_space<vmem>>) attributes {dimension_semantics = [#tpu.dimension_semantics<parallel>], iteration_bounds = array<i64: 1>, scalar_prefetch = 0 : i64, scratch_operands = 0 : i64, tpu.core_type = #tpu.core_type<tc>, window_params = [{transform_indices = @transform_0, window_bounds = array<i64: 16, 128>}, {transform_indices = @transform_1, window_bounds = array<i64: 16, 128>}]} {
    %c0 = arith.constant 0 : index
    %c0_0 = arith.constant 0 : index
    %0 = vector.load %arg1[%c0, %c0_0] : memref<16x128xf32, #tpu.memory_space<vmem>>, vector<16x128xf32>
    %1 = arith.mulf %0, %0 : vector<16x128xf32>
    %c0_1 = arith.constant 0 : index
    %c0_2 = arith.constant 0 : index
    %2 = vector.load %arg2[%c0_1, %c0_2] : memref<16x128xf32, #tpu.memory_space<vmem>>, vector<16x128xf32>
    tpu.vector_store %arg2[%c0_1, %c0_2], %1 {strides = array<i32>} : memref<16x128xf32, #tpu.memory_space<vmem>>, vector<16x128xf32>,
    return
  }
  func.func @transform_0(%arg0: i32) -> (i32, i32) {
    %c0_i32 = arith.constant 0 : i32
    %c0_i32_0 = arith.constant 0 : i32
    return %arg0, %c0_i32 : i32, i32
  }
  func.func @transform_1(%arg0: i32) -> (i32, i32) {
    %c0_i32 = arith.constant 0 : i32
    %c0_i32_0 = arith.constant 0 : i32
    return %arg0, %c0_i32 : i32, i32
  }
}

</mosaic_0001>

<llo_original>
// kernel: tpu_custom_call.1
$region0: #{tpu_custom_call.1}
  #allocation0 [shape = 'u32[]', space=smem, size = 0x4, offset = 0x4, fixed_abs, tag = 'smem constant byte address 0x4 - core index']
  #allocation1 [shape = 'u32[72,128]{1,0:T(1,128)}', space=vmem, size = 0x9000, scoped, tag = 'internal scratch']
  %s0 = inlined_call_operand.hbm [shape: f32[16,128], index: 0, kind: input, shape index: {}]
  %s1 = inlined_call_operand.hbm [shape: f32[16,128], index: 1, kind: output, shape index: {}]
  %s2 = sld [smem:[#allocation0]]
  $region18: #{tpu_custom_call.1} parent=0
    _
  %s4 = ssub.s32 1, %s2
  %s5 = scalar_select 0, %s4, %s2
  $region1: #{tpu_custom_call.1} parent=0
    #allocation2 [shape = 'u8[8192]{0}', space=vmem, size = 0x2000, scoped, tag = 'input window, operand 0, single buffered']
    #allocation3 [shape = 's32[1]{0}', space=sflag, size = 0x4, scoped, tag = 'scoped memory for tpu_custom_call.1']
    #allocation4 [shape = 's32[1]{0}', space=sflag, size = 0x4, scoped, tag = 'scoped memory for tpu_custom_call.1']
    #allocation5 [shape = 'u8[8192]{0}', space=vmem, size = 0x2000, scoped, tag = 'output window, operand 0, single buffered']
    %6 = vsyncpa [#allocation3], 0
    %7 = vsyncpa [#allocation4], 0
    // Predicated region
    $region2: #{tpu_custom_call.1} parent=1 // pred_check
      _
    $region3: #{tpu_custom_call.1} parent=1 // pred_check_branch
      %9 = sbr.rel (0) target = $region5
    $region4: #{tpu_custom_call.1} parent=1 // pred_region
      %11 = vsyncadd [#allocation3], 0
      %s12 = sshll.u32 %s0, 4
      %s13 = int_to_ptr.hbm [resolvable:$true] %s12
      %s14 = sshll.u32 [#allocation2], 4
      %s15 = int_to_ptr.vmem [resolvable:$true] %s14
      %20 = dma.hbm_to_vmem [thread:$0]  %s13, 256, %s15, [#allocation3], 128, 128, 8
    $region5: #{tpu_custom_call.1} parent=1 // pred_fallthru
      _
    // Predicated region
    $region6: #{tpu_custom_call.1} parent=1 // pred_check
      _
    $region7: #{tpu_custom_call.1} parent=1 // pred_check_branch
      %22 = sbr.rel (0) target = $region9
    $region8: #{tpu_custom_call.1} parent=1 // pred_region
      %24 = dma.done [#allocation3], 256
    $region9: #{tpu_custom_call.1} parent=1 // pred_fallthru
      _
    %v25 = vld [vmem:[#allocation2] sm:$0xff]
    %v26 = vld [vmem:[#allocation2 + $0x8] sm:$0xff]
    %v27 = vmul.f32 %v25, %v25
    %v28 = vmul.f32 %v26, %v26
    %29 = vst [vmem:[#allocation5] sm:$0xff] %v27
    %30 = vst [vmem:[#allocation5 + $0x8] sm:$0xff] %v28
    // Predicated region
    $region10: #{tpu_custom_call.1} parent=1 // pred_check
      _
    $region11: #{tpu_custom_call.1} parent=1 // pred_check_branch
      %32 = sbr.rel (0) target = $region13
    $region12: #{tpu_custom_call.1} parent=1 // pred_region
      %34 = vsyncadd [#allocation4], 0
      %s35 = sshll.u32 [#allocation5], 4
      %s36 = int_to_ptr.vmem [resolvable:$true] %s35
      %s37 = sshll.u32 %s1, 4
      %s38 = int_to_ptr.hbm [resolvable:$true] %s37
      %43 = dma.vmem_to_hbm [thread:$0]  %s36, 256, %s38, [#allocation4], 128, 128, 8
    $region13: #{tpu_custom_call.1} parent=1 // pred_fallthru
      _
    // Predicated region
    $region14: #{tpu_custom_call.1} parent=1 // pred_check
      _
    $region15: #{tpu_custom_call.1} parent=1 // pred_check_branch
      %45 = sbr.rel (0) target = $region17
    $region16: #{tpu_custom_call.1} parent=1 // pred_region
      %47 = dma.done [#allocation4], 256
    $region17: #{tpu_custom_call.1} parent=1 // pred_fallthru
      _
    %48 = vsyncpa [#allocation3], 1
    %49 = vsyncpa [#allocation4], 1

</llo_original>
